<compile_context>
chip_gen: v7x
topology: tpu7x:2x2x1
jax: 0.10.0
libtpu: 0.0.40
codegen_flags: <defaults>
</compile_context>

<pallas_src>
import functools

import jax
import jax.numpy as jnp
from jax import lax
from jax.experimental import pallas as pl
from jax.experimental.pallas import tpu as pltpu


def _complex_layernorm_kernel(eps, m_true, xr_ref, xi_ref, p_ref, or_ref, oi_ref):
    # p_ref: (4, m_pad) packed params: [weight_r, bias_r, weight_i, bias_i]
    m_pad = xr_ref.shape[-1]
    inv_m = 1.0 / float(m_true)

    mask = None
    if m_pad != m_true:
        # Padded lanes hold zeros in x (so the plain sum/mean is already
        # correct); only the centered term needs masking before the variance.
        lane = lax.broadcasted_iota(jnp.int32, (1, m_pad), 1)
        mask = lane < m_true

    p = p_ref[...]
    wr, br, wi, bi = p[0:1, :], p[1:2, :], p[2:3, :], p[3:4, :]

    def ln(x, w, b):
        # x: (bm, m_pad) f32; LayerNorm over the last (lane) axis.
        mean = jnp.sum(x, axis=-1, keepdims=True) * inv_m
        xc = x - mean
        if mask is not None:
            xc = jnp.where(mask, xc, 0.0)
        var = jnp.sum(xc * xc, axis=-1, keepdims=True) * inv_m  # biased (torch)
        inv = lax.rsqrt(var + eps)
        return xc * inv * w + b

    or_ref[...] = ln(xr_ref[...], wr, br)
    oi_ref[...] = ln(xi_ref[...], wi, bi)


def _vmem_capacity_bytes():
    """Per-TensorCore VMEM capacity; conservative 64 MiB fallback (v7x size)."""
    try:
        cap = int(pltpu.get_tpu_info().vmem_capacity_bytes)
        if cap > 0:
            return cap
    except Exception:  # pragma: no cover - info query unavailable
        pass
    return 64 * 1024 * 1024


def _choose_block_rows(n, m_pad, vmem_capacity_bytes):
    """Rows per grid step.

    Sized so the four double-buffered (bm, m_pad) f32 blocks use ~50% of the
    generation's VMEM, kept sublane-dense (multiple of 8) when possible, and
    capped so large batches get >=4 grid steps (>=2 per TensorCore on 2-TC
    chips, pipeline overlap on 1-TC chips).
    """
    bytes_per_row = 4 * m_pad * 4 * 2  # xr/xi/out_r/out_i f32 tiles, double-buffered
    budget = vmem_capacity_bytes // 2
    bm = max(1, budget // bytes_per_row)
    bm = min(bm, n)
    min_steps = 4
    if n >= min_steps * 8:  # can afford >= min_steps blocks of >= 8 rows
        bm = min(bm, pl.cdiv(n, min_steps))
    if bm >= 8:
        bm = (bm // 8) * 8  # sublane-dense (8 f32 sublanes per vreg)
    # TODO(synk): if bm == 1 still exceeds VMEM (huge M), switch to the
    # M-tiled two-phase kernel instead of relying on one row fitting.
    return max(int(bm), 1)


def complex_layer_norm_3d(x, weight_r, bias_r, weight_i, bias_i, eps=1e-5):
    """x: complex64 of shape (N, *normalized_shape). Params: f32 of normalized_shape."""
    n = x.shape[0]
    m = 1
    for d in x.shape[1:]:
        m *= d
    m_pad = max(128, pl.cdiv(m, 128) * 128)  # lane-dense blocks

    def pad_lane(v):
        if m_pad == m:
            return v
        return jnp.pad(v, ((0, 0), (0, m_pad - m)))

    xr = pad_lane(jnp.real(x).astype(jnp.float32).reshape(n, m))
    xi = pad_lane(jnp.imag(x).astype(jnp.float32).reshape(n, m))

    def prep(p):
        return pad_lane(p.reshape(1, m).astype(jnp.float32))

    params = jnp.concatenate(
        [prep(weight_r), prep(bias_r), prep(weight_i), prep(bias_i)], axis=0
    )  # (4, m_pad)

    vmem_capacity = _vmem_capacity_bytes()
    bm = _choose_block_rows(n, m_pad, vmem_capacity)
    grid = (pl.cdiv(n, bm),)

    # vmem_limit: actual block + param footprint plus headroom for Mosaic
    # internal scratch, never below the 32 MiB default and always leaving
    # >= 1/8 of physical VMEM free (matters on v7x's 64 MiB per core).
    blocks_bytes = 4 * bm * m_pad * 4 * 2
    params_bytes = 4 * m_pad * 4 * 2
    vmem_limit = max(blocks_bytes + params_bytes + (8 << 20), 32 << 20)
    vmem_limit = min(vmem_limit, vmem_capacity * 7 // 8)

    row_spec = pl.BlockSpec((bm, m_pad), lambda i: (i, 0))
    param_spec = pl.BlockSpec((4, m_pad), lambda i: (0, 0))

    out_r, out_i = pl.pallas_call(
        functools.partial(_complex_layernorm_kernel, eps, m),
        out_shape=(
            jax.ShapeDtypeStruct((n, m_pad), jnp.float32),
            jax.ShapeDtypeStruct((n, m_pad), jnp.float32),
        ),
        grid_spec=pltpu.PrefetchScalarGridSpec(
            num_scalar_prefetch=0,
            grid=grid,
            in_specs=[row_spec, row_spec, param_spec],
            out_specs=[row_spec, row_spec],
        ),
        compiler_params=pltpu.CompilerParams(
            dimension_semantics=("parallel",),
            vmem_limit_bytes=int(vmem_limit),
            # Let XLA fuse the real/imag split (+reshape/pad) producers into
            # the kernel inputs instead of materializing xr/xi in HBM.
            allow_input_fusion=[True, True, False],
        ),
    )(xr, xi, params)

    if m_pad != m:
        out_r = out_r[:, :m]
        out_i = out_i[:, :m]

    out = lax.complex(out_r, out_i)  # complex64
    return out.reshape(x.shape)


def _reference(x, weight_r, bias_r, weight_i, bias_i, eps=1e-5):
    """Pure-JAX reference mirroring torch.nn.LayerNorm applied to real & imag."""
    axes = tuple(range(1, x.ndim))

    def ln(v, w, b):
        mean = jnp.mean(v, axis=axes, keepdims=True)
        var = jnp.mean((v - mean) ** 2, axis=axes, keepdims=True)
        return (v - mean) / jnp.sqrt(var + eps) * w + b

    r = ln(jnp.real(x).astype(jnp.float32), weight_r, bias_r)
    i = ln(jnp.imag(x).astype(jnp.float32), weight_i, bias_i)
    return lax.complex(r, i)


if __name__ == "__main__":
    # Small shapes: batch=2, channels=4, D=H=W=8; normalized_shape=(C, D, H, W).
    N, C, D, H, W = 2, 4, 8, 8, 8
    normalized_shape = (C, D, H, W)

    key = jax.random.PRNGKey(0)
    k_re, k_im, k_wr, k_br, k_wi, k_bi = jax.random.split(key, 6)

    x = lax.complex(
        jax.random.normal(k_re, (N, C, D, H, W), dtype=jnp.float32),
        jax.random.normal(k_im, (N, C, D, H, W), dtype=jnp.float32),
    )  # complex64

    # Deterministic parameter init (perturbed from torch's ones/zeros default
    # so the affine path is actually exercised).
    weight_r = 1.0 + 0.1 * jax.random.normal(k_wr, normalized_shape, dtype=jnp.float32)
    bias_r = 0.1 * jax.random.normal(k_br, normalized_shape, dtype=jnp.float32)
    weight_i = 1.0 + 0.1 * jax.random.normal(k_wi, normalized_shape, dtype=jnp.float32)
    bias_i = 0.1 * jax.random.normal(k_bi, normalized_shape, dtype=jnp.float32)

    out = complex_layer_norm_3d(x, weight_r, bias_r, weight_i, bias_i)
    out = jax.block_until_ready(out)

    ref = _reference(x, weight_r, bias_r, weight_i, bias_i)
    assert out.shape == x.shape and out.dtype == jnp.complex64
    assert jnp.allclose(jnp.real(out), jnp.real(ref), atol=1e-5, rtol=1e-5)
    assert jnp.allclose(jnp.imag(out), jnp.imag(ref), atol=1e-5, rtol=1e-5)

    print("KERNEL_OK")
</pallas_src>

<mosaic_0001>
module attributes {stable_mosaic.version = 11 : i64} {
  func.func @_complex_layernorm_kernel(%arg0: i32, %arg1: memref<2x2048xf32, #tpu.memory_space<vmem>>, %arg2: memref<2x2048xf32, #tpu.memory_space<vmem>>, %arg3: memref<4x2048xf32, #tpu.memory_space<vmem>>, %arg4: memref<2x2048xf32, #tpu.memory_space<vmem>>, %arg5: memref<2x2048xf32, #tpu.memory_space<vmem>>) attributes {dimension_semantics = [#tpu.dimension_semantics<parallel>], iteration_bounds = array<i64: 1>, scalar_prefetch = 0 : i64, scratch_operands = 0 : i64, tpu.core_type = #tpu.core_type<tc>, window_params = [{transform_indices = @transform_0, window_bounds = array<i64: 2, 2048>}, {transform_indices = @transform_1, window_bounds = array<i64: 2, 2048>}, {pipeline_mode = #tpu.pipeline_mode<synchronous>, transform_indices = @transform_2, window_bounds = array<i64: 4, 2048>}, {transform_indices = @transform_3, window_bounds = array<i64: 2, 2048>}, {transform_indices = @transform_4, window_bounds = array<i64: 2, 2048>}]} {
    %c0 = arith.constant 0 : index
    %c0_0 = arith.constant 0 : index
    %0 = vector.load %arg3[%c0, %c0_0] : memref<4x2048xf32, #tpu.memory_space<vmem>>, vector<4x2048xf32>
    %1 = vector.extract_strided_slice %0 {offsets = [0, 0], sizes = [1, 2048], strides = [1, 1]} : vector<4x2048xf32> to vector<1x2048xf32>
    %2 = vector.extract_strided_slice %0 {offsets = [1, 0], sizes = [1, 2048], strides = [1, 1]} : vector<4x2048xf32> to vector<1x2048xf32>
    %3 = vector.extract_strided_slice %0 {offsets = [2, 0], sizes = [1, 2048], strides = [1, 1]} : vector<4x2048xf32> to vector<1x2048xf32>
    %4 = vector.extract_strided_slice %0 {offsets = [3, 0], sizes = [1, 2048], strides = [1, 1]} : vector<4x2048xf32> to vector<1x2048xf32>
    %c0_1 = arith.constant 0 : index
    %c0_2 = arith.constant 0 : index
    %5 = vector.load %arg1[%c0_1, %c0_2] : memref<2x2048xf32, #tpu.memory_space<vmem>>, vector<2x2048xf32>
    %cst = arith.constant dense<0.000000e+00> : vector<2xf32>
    %6 = vector.multi_reduction <add>, %5, %cst [1] : vector<2x2048xf32> to vector<2xf32>
    %7 = vector.shape_cast %6 : vector<2xf32> to vector<2x1xf32>
    %cst_3 = arith.constant 4.8828125E-4 : f32
    %8 = vector.broadcast %cst_3 : f32 to vector<2x1xf32>
    %9 = arith.mulf %7, %8 : vector<2x1xf32>
    %10 = vector.broadcast %9 : vector<2x1xf32> to vector<2x2048xf32>
    %11 = arith.subf %5, %10 : vector<2x2048xf32>
    %12 = arith.mulf %11, %11 : vector<2x2048xf32>
    %cst_4 = arith.constant dense<0.000000e+00> : vector<2xf32>
    %13 = vector.multi_reduction <add>, %12, %cst_4 [1] : vector<2x2048xf32> to vector<2xf32>
    %14 = vector.shape_cast %13 : vector<2xf32> to vector<2x1xf32>
    %cst_5 = arith.constant 4.8828125E-4 : f32
    %15 = vector.broadcast %cst_5 : f32 to vector<2x1xf32>
    %16 = arith.mulf %14, %15 : vector<2x1xf32>
    %cst_6 = arith.constant 9.99999974E-6 : f32
    %17 = vector.broadcast %cst_6 : f32 to vector<2x1xf32>
    %18 = arith.addf %16, %17 : vector<2x1xf32>
    %19 = math.rsqrt %18 : vector<2x1xf32>
    %20 = vector.broadcast %19 : vector<2x1xf32> to vector<2x2048xf32>
    %21 = arith.mulf %11, %20 : vector<2x2048xf32>
    %22 = vector.broadcast %1 : vector<1x2048xf32> to vector<2x2048xf32>
    %23 = arith.mulf %21, %22 : vector<2x2048xf32>
    %24 = vector.broadcast %2 : vector<1x2048xf32> to vector<2x2048xf32>
    %25 = arith.addf %23, %24 : vector<2x2048xf32>
    %c0_7 = arith.constant 0 : index
    %c0_8 = arith.constant 0 : index
    %26 = vector.load %arg4[%c0_7, %c0_8] : memref<2x2048xf32, #tpu.memory_space<vmem>>, vector<2x2048xf32>
    tpu.vector_store %arg4[%c0_7, %c0_8], %25 {strides = array<i32>} : memref<2x2048xf32, #tpu.memory_space<vmem>>, vector<2x2048xf32>,
    %c0_9 = arith.constant 0 : index
    %c0_10 = arith.constant 0 : index
    %27 = vector.load %arg2[%c0_9, %c0_10] : memref<2x2048xf32, #tpu.memory_space<vmem>>, vector<2x2048xf32>
    %cst_11 = arith.constant dense<0.000000e+00> : vector<2xf32>
    %28 = vector.multi_reduction <add>, %27, %cst_11 [1] : vector<2x2048xf32> to vector<2xf32>
    %29 = vector.shape_cast %28 : vector<2xf32> to vector<2x1xf32>
    %cst_12 = arith.constant 4.8828125E-4 : f32
    %30 = vector.broadcast %cst_12 : f32 to vector<2x1xf32>
    %31 = arith.mulf %29, %30 : vector<2x1xf32>
    %32 = vector.broadcast %31 : vector<2x1xf32> to vector<2x2048xf32>
    %33 = arith.subf %27, %32 : vector<2x2048xf32>
    %34 = arith.mulf %33, %33 : vector<2x2048xf32>
    %cst_13 = arith.constant dense<0.000000e+00> : vector<2xf32>
    %35 = vector.multi_reduction <add>, %34, %cst_13 [1] : vector<2x2048xf32> to vector<2xf32>
    %36 = vector.shape_cast %35 : vector<2xf32> to vector<2x1xf32>
    %cst_14 = arith.constant 4.8828125E-4 : f32
    %37 = vector.broadcast %cst_14 : f32 to vector<2x1xf32>
    %38 = arith.mulf %36, %37 : vector<2x1xf32>
    %cst_15 = arith.constant 9.99999974E-6 : f32
    %39 = vector.broadcast %cst_15 : f32 to vector<2x1xf32>
    %40 = arith.addf %38, %39 : vector<2x1xf32>
    %41 = math.rsqrt %40 : vector<2x1xf32>
    %42 = vector.broadcast %41 : vector<2x1xf32> to vector<2x2048xf32>
    %43 = arith.mulf %33, %42 : vector<2x2048xf32>
    %44 = vector.broadcast %3 : vector<1x2048xf32> to vector<2x2048xf32>
    %45 = arith.mulf %43, %44 : vector<2x2048xf32>
    %46 = vector.broadcast %4 : vector<1x2048xf32> to vector<2x2048xf32>
    %47 = arith.addf %45, %46 : vector<2x2048xf32>
    %c0_16 = arith.constant 0 : index
    %c0_17 = arith.constant 0 : index
    %48 = vector.load %arg5[%c0_16, %c0_17] : memref<2x2048xf32, #tpu.memory_space<vmem>>, vector<2x2048xf32>
    tpu.vector_store %arg5[%c0_16, %c0_17], %47 {strides = array<i32>} : memref<2x2048xf32, #tpu.memory_space<vmem>>, vector<2x2048xf32>,
    return
  }
  func.func @transform_0(%arg0: i32) -> (i32, i32) {
    %c0_i32 = arith.constant 0 : i32
    %c0_i32_0 = arith.constant 0 : i32
    return %arg0, %c0_i32 : i32, i32
  }
  func.func @transform_1(%arg0: i32) -> (i32, i32) {
    %c0_i32 = arith.constant 0 : i32
    %c0_i32_0 = arith.constant 0 : i32
    return %arg0, %c0_i32 : i32, i32
  }
  func.func @transform_2(%arg0: i32) -> (i32, i32) {
    %c0_i32 = arith.constant 0 : i32
    %c0_i32_0 = arith.constant 0 : i32
    %c0_i32_1 = arith.constant 0 : i32
    return %c0_i32, %c0_i32_0 : i32, i32
  }
  func.func @transform_3(%arg0: i32) -> (i32, i32) {
    %c0_i32 = arith.constant 0 : i32
    %c0_i32_0 = arith.constant 0 : i32
    return %arg0, %c0_i32 : i32, i32
  }
  func.func @transform_4(%arg0: i32) -> (i32, i32) {
    %c0_i32 = arith.constant 0 : i32
    %c0_i32_0 = arith.constant 0 : i32
    return %arg0, %c0_i32 : i32, i32
  }
}

</mosaic_0001>

<llo_original>
// kernel: tpu_custom_call.1
$region0: #{tpu_custom_call.1}
  #allocation0 [shape = 'u32[]', space=smem, size = 0x4, offset = 0x4, fixed_abs, tag = 'smem constant byte address 0x4 - core index']
  #allocation1 [shape = 'u32[144,128]{1,0:T(1,128)}', space=vmem, size = 0x12000, scoped, tag = 'internal scratch']
  %s0 = inlined_call_operand.hbm [shape: f32[2,2048], index: 0, kind: input, shape index: {}]
  %s1 = inlined_call_operand.hbm [shape: f32[2,2048], index: 1, kind: input, shape index: {}]
  %s2 = inlined_call_operand.hbm [shape: f32[4,2048], index: 2, kind: input, shape index: {}]
  %s3 = inlined_call_operand.hbm [shape: f32[2,2048], index: 3, kind: output, shape index: {0}]
  %s4 = inlined_call_operand.hbm [shape: f32[2,2048], index: 4, kind: output, shape index: {1}]
  %5 = xla_tuple %s3, %s4
  %s6 = sld [smem:[#allocation0]]
  $region42: #{tpu_custom_call.1} parent=0
    _
  %s8 = ssub.s32 1, %s6
  %s9 = scalar_select 0, %s8, %s6
  $region1: #{tpu_custom_call.1} parent=0
    #allocation2 [shape = 'u8[16384]{0}', space=vmem, size = 0x4000, scoped, tag = 'input window, operand 0, single buffered']
    #allocation3 [shape = 's32[1]{0}', space=sflag, size = 0x4, scoped, tag = 'scoped memory for tpu_custom_call.1']
    #allocation4 [shape = 's32[1]{0}', space=sflag, size = 0x4, scoped, tag = 'scoped memory for tpu_custom_call.1']
    #allocation5 [shape = 'u8[16384]{0}', space=vmem, size = 0x4000, scoped, tag = 'input window, operand 1, single buffered']
    #allocation6 [shape = 's32[1]{0}', space=sflag, size = 0x4, scoped, tag = 'scoped memory for tpu_custom_call.1']
    #allocation7 [shape = 'u8[32768]{0}', space=vmem, size = 0x8000, scoped, tag = 'input window, operand 2, single buffered']
    #allocation8 [shape = 'u8[16384]{0}', space=vmem, size = 0x4000, scoped, tag = 'output window, operand 0, single buffered']
    #allocation9 [shape = 'u8[16384]{0}', space=vmem, size = 0x4000, scoped, tag = 'output window, operand 1, single buffered']
    #allocation10 [shape = 's32[1]{0}', space=sflag, size = 0x4, scoped, tag = 'scoped memory for tpu_custom_call.1']
    %10 = vsyncpa [#allocation3], 0
    %11 = vsyncpa [#allocation6], 0
    %12 = vsyncpa [#allocation4], 0
    %13 = vsyncpa [#allocation10], 0
    // Predicated region
    $region2: #{tpu_custom_call.1} parent=1 // pred_check
      _
    $region3: #{tpu_custom_call.1} parent=1 // pred_check_branch
      %15 = sbr.rel (0) target = $region5
    $region4: #{tpu_custom_call.1} parent=1 // pred_region
      %s17 = ssub.s32 512, 512
      %18 = vsyncadd [#allocation3], %s17
      %s20 = sshll.u32 [#allocation2], 4
      %s21 = int_to_ptr.vmem [resolvable:$true] %s20
      %23 = dma.hbm_to_vmem [thread:$0]  %s0, 512, %s21, [#allocation3]
    $region5: #{tpu_custom_call.1} parent=1 // pred_fallthru
      _
    // Predicated region
    $region6: #{tpu_custom_call.1} parent=1 // pred_check
      _
    $region7: #{tpu_custom_call.1} parent=1 // pred_check_branch
      %25 = sbr.rel (0) target = $region9
    $region8: #{tpu_custom_call.1} parent=1 // pred_region
      %s27 = ssub.s32 512, 512
      %28 = vsyncadd [#allocation6], %s27
      %s30 = sshll.u32 [#allocation5], 4
      %s31 = int_to_ptr.vmem [resolvable:$true] %s30
      %33 = dma.hbm_to_vmem [thread:$0]  %s1, 512, %s31, [#allocation6]
    $region9: #{tpu_custom_call.1} parent=1 // pred_fallthru
      _
    // Predicated region
    $region10: #{tpu_custom_call.1} parent=1 // pred_check
      _
    $region11: #{tpu_custom_call.1} parent=1 // pred_check_branch
      %35 = sbr.rel (0) target = $region13
    $region12: #{tpu_custom_call.1} parent=1 // pred_region
      %s37 = ssub.s32 1024, 1024
      %38 = vsyncadd [#allocation6], %s37
      %s40 = sshll.u32 [#allocation7], 4
      %s41 = int_to_ptr.vmem [resolvable:$true] %s40
      %43 = dma.hbm_to_vmem [thread:$0]  %s2, 1024, %s41, [#allocation6]
    $region13: #{tpu_custom_call.1} parent=1 // pred_fallthru
      _
    // Predicated region
    $region14: #{tpu_custom_call.1} parent=1 // pred_check
      _
    $region15: #{tpu_custom_call.1} parent=1 // pred_check_branch
      %45 = sbr.rel (0) target = $region17
    $region16: #{tpu_custom_call.1} parent=1 // pred_region
      %46 = dma.done [#allocation3], 512
    $region17: #{tpu_custom_call.1} parent=1 // pred_fallthru
      _
    // Predicated region
    $region18: #{tpu_custom_call.1} parent=1 // pred_check
      _
    $region19: #{tpu_custom_call.1} parent=1 // pred_check_branch
      %48 = sbr.rel (0) target = $region21
    $region20: #{tpu_custom_call.1} parent=1 // pred_region
      %49 = dma.done [#allocation6], 512
    $region21: #{tpu_custom_call.1} parent=1 // pred_fallthru
      _
    // Predicated region
    $region22: #{tpu_custom_call.1} parent=1 // pred_check
      _
    $region23: #{tpu_custom_call.1} parent=1 // pred_check_branch
      %51 = sbr.rel (0) target = $region25
    $region24: #{tpu_custom_call.1} parent=1 // pred_region
      %52 = dma.done [#allocation6], 1024
    $region25: #{tpu_custom_call.1} parent=1 // pred_fallthru
      _
    %v53 = vld [vmem:[#allocation7] sm:$0xff]
    %v54 = vld [vmem:[#allocation7 + $0x8] sm:$0xff]
    %v55 = vld [vmem:[#allocation7 + $0x10] sm:$0xff]
    %v56 = vld [vmem:[#allocation7 + $0x18] sm:$0xff]
    %v57 = vld [vmem:[#allocation7 + $0x20] sm:$0xff]
    %v58 = vld [vmem:[#allocation7 + $0x28] sm:$0xff]
    %v59 = vld [vmem:[#allocation7 + $0x30] sm:$0xff]
    %v60 = vld [vmem:[#allocation7 + $0x38] sm:$0xff]
    %v61 = vld [vmem:[#allocation2] sm:$0xff]
    %v62 = vld [vmem:[#allocation2 + $0x8] sm:$0xff]
    %v63 = vld [vmem:[#allocation2 + $0x10] sm:$0xff]
    %v64 = vld [vmem:[#allocation2 + $0x18] sm:$0xff]
    %v69 = vcombine.high %v61, %v61
    %v71 = vunpack.c.l.s4 1983009808
    %v72 = vunpack.c.0.s8 %v71
    %v73 = vlaneseq
    %v74 = vshrl.u32 %v73, 7
    %v75 = vsub.s32 %v72, %v74
    %v76 = vrot.slane %v61, %v75
    %v78 = vunpack.c.l.s4 1983009808
    %v79 = vunpack.c.0.s8 %v78
    %v80 = vlaneseq
    %v81 = vshrl.u32 %v80, 7
    %v82 = vsub.s32 %v79, %v81
    %v83 = vrot.slane %v69, %v82
    %v84 = vcombine.high %v76, %v76
    %v85 = vcombine.high %v83, %v83
    %v86 = vcombine.high %v62, %v62
    %v88 = vunpack.c.l.s4 1983009808
    %v89 = vunpack.c.0.s8 %v88
    %v90 = vlaneseq
    %v91 = vshrl.u32 %v90, 7
    %v92 = vsub.s32 %v89, %v91
    %v93 = vrot.slane %v62, %v92
    %v95 = vunpack.c.l.s4 1983009808
    %v96 = vunpack.c.0.s8 %v95
    %v97 = vlaneseq
    %v98 = vshrl.u32 %v97, 7
    %v99 = vsub.s32 %v96, %v98
    %v100 = vrot.slane %v86, %v99
    %v101 = vcombine.high %v93, %v93
    %v102 = vcombine.high %v100, %v100
    %v103 = vcombine.high %v63, %v63
    %v105 = vunpack.c.l.s4 1983009808
    %v106 = vunpack.c.0.s8 %v105
    %v107 = vlaneseq
    %v108 = vshrl.u32 %v107, 7
    %v109 = vsub.s32 %v106, %v108
    %v110 = vrot.slane %v63, %v109
    %v112 = vunpack.c.l.s4 1983009808
    %v113 = vunpack.c.0.s8 %v112
    %v114 = vlaneseq
    %v115 = vshrl.u32 %v114, 7
    %v116 = vsub.s32 %v113, %v115
    %v117 = vrot.slane %v103, %v116
    %v118 = vcombine.high %v110, %v110
    %v119 = vcombine.high %v117, %v117
    %v120 = vcombine.high %v64, %v64
    %v122 = vunpack.c.l.s4 1983009808
    %v123 = vunpack.c.0.s8 %v122
    %v124 = vlaneseq
    %v125 = vshrl.u32 %v124, 7
    %v126 = vsub.s32 %v123, %v125
    %v127 = vrot.slane %v64, %v126
    %v129 = vunpack.c.l.s4 1983009808
    %v130 = vunpack.c.0.s8 %v129
    %v131 = vlaneseq
    %v132 = vshrl.u32 %v131, 7
    %v133 = vsub.s32 %v130, %v132
    %v134 = vrot.slane %v120, %v133
    %v135 = vcombine.high %v127, %v127
    %v136 = vcombine.high %v134, %v134
    %vm153 = vcmask 1041408
    %v154 = vsel %vm153, %v76, 0.0
    %v155 = vsel %vm153, %v84, 0.0
    %v156 = vadd.f32 %v154, %v155
    %v157 = vsel %vm153, %v83, 0.0
    %v158 = vadd.f32 %v156, %v157
    %v159 = vsel %vm153, %v85, 0.0
    %v160 = vadd.f32 %v158, %v159
    %v161 = vsel %vm153, %v93, 0.0
    %v162 = vadd.f32 %v160, %v161
    %v163 = vsel %vm153, %v101, 0.0
    %v164 = vadd.f32 %v162, %v163
    %v165 = vsel %vm153, %v100, 0.0
    %v166 = vadd.f32 %v164, %v165
    %v167 = vsel %vm153, %v102, 0.0
    %v168 = vadd.f32 %v166, %v167
    %v169 = vsel %vm153, %v110, 0.0
    %v170 = vadd.f32 %v168, %v169
    %v171 = vsel %vm153, %v118, 0.0
    %v172 = vadd.f32 %v170, %v171
    %v173 = vsel %vm153, %v117, 0.0
    %v174 = vadd.f32 %v172, %v173
    %v175 = vsel %vm153, %v119, 0.0
    %v176 = vadd.f32 %v174, %v175
    %v177 = vsel %vm153, %v127, 0.0
    %v178 = vadd.f32 %v176, %v177
    %v179 = vsel %vm153, %v135, 0.0
    %v180 = vadd.f32 %v178, %v179
    %v181 = vsel %vm153, %v134, 0.0
    %v182 = vadd.f32 %v180, %v181
    %v183 = vsel %vm153, %v136, 0.0
    %v184 = vadd.f32 %v182, %v183
    %185 = vadd.xlane.f32.xlu0 %v184
    %v186 = vpop.xlane.xlu0 %185
    %v187 = vmul.f32 %v186, 0.00048828125
    %v190 = vunpack.c.l.s4 269488144
    %v191 = vunpack.c.0.s8 %v190
    %v192 = vlaneseq
    %v193 = vshrl.u32 %v192, 7
    %v194 = vsub.s32 %v191, %v193
    %v195 = vrot.slane %v187, %v194
    %v197 = vsub.f32 %v61, %v195
    %v198 = vsub.f32 %v62, %v195
    %v199 = vsub.f32 %v63, %v195
    %v200 = vsub.f32 %v64, %v195
    %v201 = vmul.f32 %v197, %v197
    %v202 = vmul.f32 %v198, %v198
    %v203 = vmul.f32 %v199, %v199
    %v204 = vmul.f32 %v200, %v200
    %v209 = vcombine.high %v201, %v201
    %v211 = vunpack.c.l.s4 1983009808
    %v212 = vunpack.c.0.s8 %v211
    %v213 = vlaneseq
    %v214 = vshrl.u32 %v213, 7
    %v215 = vsub.s32 %v212, %v214
    %v216 = vrot.slane %v201, %v215
    %v218 = vunpack.c.l.s4 1983009808
    %v219 = vunpack.c.0.s8 %v218
    %v220 = vlaneseq
    %v221 = vshrl.u32 %v220, 7
    %v222 = vsub.s32 %v219, %v221
    %v223 = vrot.slane %v209, %v222
    %v224 = vcombine.high %v216, %v216
    %v225 = vcombine.high %v223, %v223
    %v226 = vcombine.high %v202, %v202
    %v228 = vunpack.c.l.s4 1983009808
    %v229 = vunpack.c.0.s8 %v228
    %v230 = vlaneseq
    %v231 = vshrl.u32 %v230, 7
    %v232 = vsub.s32 %v229, %v231
    %v233 = vrot.slane %v202, %v232
    %v235 = vunpack.c.l.s4 1983009808
    %v236 = vunpack.c.0.s8 %v235
    %v237 = vlaneseq
    %v238 = vshrl.u32 %v237, 7
    %v239 = vsub.s32 %v236, %v238
    %v240 = vrot.slane %v226, %v239
    %v241 = vcombine.high %v233, %v233
    %v242 = vcombine.high %v240, %v240
    %v243 = vcombine.high %v203, %v203
    %v245 = vunpack.c.l.s4 1983009808
    %v246 = vunpack.c.0.s8 %v245
    %v247 = vlaneseq
    %v248 = vshrl.u32 %v247, 7
    %v249 = vsub.s32 %v246, %v248
    %v250 = vrot.slane %v203, %v249
    %v252 = vunpack.c.l.s4 1983009808
    %v253 = vunpack.c.0.s8 %v252
    %v254 = vlaneseq
    %v255 = vshrl.u32 %v254, 7
    %v256 = vsub.s32 %v253, %v255
    %v257 = vrot.slane %v243, %v256
    %v258 = vcombine.high %v250, %v250
    %v259 = vcombine.high %v257, %v257
    %v260 = vcombine.high %v204, %v204
    %v262 = vunpack.c.l.s4 1983009808
    %v263 = vunpack.c.0.s8 %v262
    %v264 = vlaneseq
    %v265 = vshrl.u32 %v264, 7
    %v266 = vsub.s32 %v263, %v265
    %v267 = vrot.slane %v204, %v266
    %v269 = vunpack.c.l.s4 1983009808
    %v270 = vunpack.c.0.s8 %v269
    %v271 = vlaneseq
    %v272 = vshrl.u32 %v271, 7
    %v273 = vsub.s32 %v270, %v272
    %v274 = vrot.slane %v260, %v273
    %v275 = vcombine.high %v267, %v267
    %v276 = vcombine.high %v274, %v274
    %v293 = vsel %vm153, %v216, 0.0
    %v294 = vsel %vm153, %v224, 0.0
    %v295 = vadd.f32 %v293, %v294
    %v296 = vsel %vm153, %v223, 0.0
    %v297 = vadd.f32 %v295, %v296
    %v298 = vsel %vm153, %v225, 0.0
    %v299 = vadd.f32 %v297, %v298
    %v300 = vsel %vm153, %v233, 0.0
    %v301 = vadd.f32 %v299, %v300
    %v302 = vsel %vm153, %v241, 0.0
    %v303 = vadd.f32 %v301, %v302
    %v304 = vsel %vm153, %v240, 0.0
    %v305 = vadd.f32 %v303, %v304
    %v306 = vsel %vm153, %v242, 0.0
    %v307 = vadd.f32 %v305, %v306
    %v308 = vsel %vm153, %v250, 0.0
    %v309 = vadd.f32 %v307, %v308
    %v310 = vsel %vm153, %v258, 0.0
    %v311 = vadd.f32 %v309, %v310
    %v312 = vsel %vm153, %v257, 0.0
    %v313 = vadd.f32 %v311, %v312
    %v314 = vsel %vm153, %v259, 0.0
    %v315 = vadd.f32 %v313, %v314
    %v316 = vsel %vm153, %v267, 0.0
    %v317 = vadd.f32 %v315, %v316
    %v318 = vsel %vm153, %v275, 0.0
    %v319 = vadd.f32 %v317, %v318
    %v320 = vsel %vm153, %v274, 0.0
    %v321 = vadd.f32 %v319, %v320
    %v322 = vsel %vm153, %v276, 0.0
    %v323 = vadd.f32 %v321, %v322
    %324 = vadd.xlane.f32.xlu0 %v323
    %v325 = vpop.xlane.xlu0 %324
    %v326 = vmul.f32 %v325, 0.00048828125
    %v327 = vadd.f32 %v326, 1e-05
    %v328 = vrsqrt.pop %v327
    %v331 = vunpack.c.l.s4 269488144
    %v332 = vunpack.c.0.s8 %v331
    %v333 = vlaneseq
    %v334 = vshrl.u32 %v333, 7
    %v335 = vsub.s32 %v332, %v334
    %v336 = vrot.slane %v328, %v335
    %v338 = vmul.f32 %v197, %v336
    %v339 = vmul.f32 %v198, %v336
    %v340 = vmul.f32 %v199, %v336
    %v341 = vmul.f32 %v200, %v336
    %v350 = vlaneseq
    %v351 = vshrl.u32 %v350, 7
    %v352 = vsub.s32 0, %v351
    %v353 = vrot.slane %v53, %v352
    %v354 = vlaneseq
    %v355 = vshrl.u32 %v354, 7
    %v356 = vsub.s32 4, %v355
    %v357 = vrot.slane %v53, %v356
    %v358 = vlaneseq
    %v359 = vshrl.u32 %v358, 7
    %v360 = vsub.s32 0, %v359
    %v361 = vrot.slane %v54, %v360
    %v362 = vlaneseq
    %v363 = vshrl.u32 %v362, 7
    %v364 = vsub.s32 4, %v363
    %v365 = vrot.slane %v54, %v364
    %v366 = vlaneseq
    %v367 = vshrl.u32 %v366, 7
    %v368 = vsub.s32 0, %v367
    %v369 = vrot.slane %v55, %v368
    %v370 = vlaneseq
    %v371 = vshrl.u32 %v370, 7
    %v372 = vsub.s32 4, %v371
    %v373 = vrot.slane %v55, %v372
    %v374 = vlaneseq
    %v375 = vshrl.u32 %v374, 7
    %v376 = vsub.s32 0, %v375
    %v377 = vrot.slane %v56, %v376
    %v378 = vlaneseq
    %v379 = vshrl.u32 %v378, 7
    %v380 = vsub.s32 4, %v379
    %v381 = vrot.slane %v56, %v380
    %v382 = vlaneseq
    %v383 = vshrl.u32 %v382, 7
    %v384 = vsub.s32 0, %v383
    %v385 = vrot.slane %v57, %v384
    %v386 = vlaneseq
    %v387 = vshrl.u32 %v386, 7
    %v388 = vsub.s32 4, %v387
    %v389 = vrot.slane %v57, %v388
    %v390 = vlaneseq
    %v391 = vshrl.u32 %v390, 7
    %v392 = vsub.s32 0, %v391
    %v393 = vrot.slane %v58, %v392
    %v394 = vlaneseq
    %v395 = vshrl.u32 %v394, 7
    %v396 = vsub.s32 4, %v395
    %v397 = vrot.slane %v58, %v396
    %v398 = vlaneseq
    %v399 = vshrl.u32 %v398, 7
    %v400 = vsub.s32 0, %v399
    %v401 = vrot.slane %v59, %v400
    %v402 = vlaneseq
    %v403 = vshrl.u32 %v402, 7
    %v404 = vsub.s32 4, %v403
    %v405 = vrot.slane %v59, %v404
    %v406 = vlaneseq
    %v407 = vshrl.u32 %v406, 7
    %v408 = vsub.s32 0, %v407
    %v409 = vrot.slane %v60, %v408
    %v410 = vlaneseq
    %v411 = vshrl.u32 %v410, 7
    %v412 = vsub.s32 4, %v411
    %v413 = vrot.slane %v60, %v412
    %v430 = vlaneseq
    %v431 = vshrl.u32 %v430, 7
    %v432 = vsub.s32 0, %v431
    %v433 = vrot.slane %v353, %v432
    %v434 = vlaneseq
    %v435 = vshrl.u32 %v434, 7
    %v436 = vsub.s32 0, %v435
    %v437 = vrot.slane %v357, %v436
    %v438 = vlaneseq
    %v439 = vshrl.u32 %v438, 7
    %v440 = vsub.s32 0, %v439
    %v441 = vrot.slane %v361, %v440
    %v442 = vlaneseq
    %v443 = vshrl.u32 %v442, 7
    %v444 = vsub.s32 0, %v443
    %v445 = vrot.slane %v365, %v444
    %v446 = vlaneseq
    %v447 = vshrl.u32 %v446, 7
    %v448 = vsub.s32 0, %v447
    %v449 = vrot.slane %v369, %v448
    %v450 = vlaneseq
    %v451 = vshrl.u32 %v450, 7
    %v452 = vsub.s32 0, %v451
    %v453 = vrot.slane %v373, %v452
    %v454 = vlaneseq
    %v455 = vshrl.u32 %v454, 7
    %v456 = vsub.s32 0, %v455
    %v457 = vrot.slane %v377, %v456
    %v458 = vlaneseq
    %v459 = vshrl.u32 %v458, 7
    %v460 = vsub.s32 0, %v459
    %v461 = vrot.slane %v381, %v460
    %v462 = vlaneseq
    %v463 = vshrl.u32 %v462, 7
    %v464 = vsub.s32 0, %v463
    %v465 = vrot.slane %v385, %v464
    %v466 = vlaneseq
    %v467 = vshrl.u32 %v466, 7
    %v468 = vsub.s32 0, %v467
    %v469 = vrot.slane %v389, %v468
    %v470 = vlaneseq
    %v471 = vshrl.u32 %v470, 7
    %v472 = vsub.s32 0, %v471
    %v473 = vrot.slane %v393, %v472
    %v474 = vlaneseq
    %v475 = vshrl.u32 %v474, 7
    %v476 = vsub.s32 0, %v475
    %v477 = vrot.slane %v397, %v476
    %v478 = vlaneseq
    %v479 = vshrl.u32 %v478, 7
    %v480 = vsub.s32 0, %v479
    %v481 = vrot.slane %v401, %v480
    %v482 = vlaneseq
    %v483 = vshrl.u32 %v482, 7
    %v484 = vsub.s32 0, %v483
    %v485 = vrot.slane %v405, %v484
    %v486 = vlaneseq
    %v487 = vshrl.u32 %v486, 7
    %v488 = vsub.s32 0, %v487
    %v489 = vrot.slane %v409, %v488
    %v490 = vlaneseq
    %v491 = vshrl.u32 %v490, 7
    %v492 = vsub.s32 0, %v491
    %v493 = vrot.slane %v413, %v492
    %v510 = vcombine.low %v433, %v437
    %v511 = vcombine.low %v441, %v445
    %v513 = vunpack.c.l.s4 1983009808
    %v514 = vunpack.c.0.s8 %v513
    %v515 = vlaneseq
    %v516 = vshrl.u32 %v515, 7
    %v517 = vsub.s32 %v514, %v516
    %v518 = vrot.slane %v510, %v517
    %v520 = vunpack.c.l.s4 1983009808
    %v521 = vunpack.c.0.s8 %v520
    %v522 = vlaneseq
    %v523 = vshrl.u32 %v522, 7
    %v524 = vsub.s32 %v521, %v523
    %v525 = vrot.slane %v511, %v524
    %v526 = vcombine.low %v518, %v525
    %v527 = vcombine.low %v449, %v453
    %v528 = vcombine.low %v457, %v461
    %v530 = vunpack.c.l.s4 1983009808
    %v531 = vunpack.c.0.s8 %v530
    %v532 = vlaneseq
    %v533 = vshrl.u32 %v532, 7
    %v534 = vsub.s32 %v531, %v533
    %v535 = vrot.slane %v527, %v534
    %v537 = vunpack.c.l.s4 1983009808
    %v538 = vunpack.c.0.s8 %v537
    %v539 = vlaneseq
    %v540 = vshrl.u32 %v539, 7
    %v541 = vsub.s32 %v538, %v540
    %v542 = vrot.slane %v528, %v541
    %v543 = vcombine.low %v535, %v542
    %v544 = vcombine.low %v465, %v469
    %v545 = vcombine.low %v473, %v477
    %v547 = vunpack.c.l.s4 1983009808
    %v548 = vunpack.c.0.s8 %v547
    %v549 = vlaneseq
    %v550 = vshrl.u32 %v549, 7
    %v551 = vsub.s32 %v548, %v550
    %v552 = vrot.slane %v544, %v551
    %v554 = vunpack.c.l.s4 1983009808
    %v555 = vunpack.c.0.s8 %v554
    %v556 = vlaneseq
    %v557 = vshrl.u32 %v556, 7
    %v558 = vsub.s32 %v555, %v557
    %v559 = vrot.slane %v545, %v558
    %v560 = vcombine.low %v552, %v559
    %v561 = vcombine.low %v481, %v485
    %v562 = vcombine.low %v489, %v493
    %v564 = vunpack.c.l.s4 1983009808
    %v565 = vunpack.c.0.s8 %v564
    %v566 = vlaneseq
    %v567 = vshrl.u32 %v566, 7
    %v568 = vsub.s32 %v565, %v567
    %v569 = vrot.slane %v561, %v568
    %v571 = vunpack.c.l.s4 1983009808
    %v572 = vunpack.c.0.s8 %v571
    %v573 = vlaneseq
    %v574 = vshrl.u32 %v573, 7
    %v575 = vsub.s32 %v572, %v574
    %v576 = vrot.slane %v562, %v575
    %v577 = vcombine.low %v569, %v576
    %v582 = vmul.f32 %v338, %v526
    %v583 = vmul.f32 %v339, %v543
    %v584 = vmul.f32 %v340, %v560
    %v585 = vmul.f32 %v341, %v577
    %v586 = vlaneseq
    %v587 = vshrl.u32 %v586, 7
    %v588 = vsub.s32 1, %v587
    %v589 = vrot.slane %v53, %v588
    %v590 = vlaneseq
    %v591 = vshrl.u32 %v590, 7
    %v592 = vsub.s32 5, %v591
    %v593 = vrot.slane %v53, %v592
    %v594 = vlaneseq
    %v595 = vshrl.u32 %v594, 7
    %v596 = vsub.s32 1, %v595
    %v597 = vrot.slane %v54, %v596
    %v598 = vlaneseq
    %v599 = vshrl.u32 %v598, 7
    %v600 = vsub.s32 5, %v599
    %v601 = vrot.slane %v54, %v600
    %v602 = vlaneseq
    %v603 = vshrl.u32 %v602, 7
    %v604 = vsub.s32 1, %v603
    %v605 = vrot.slane %v55, %v604
    %v606 = vlaneseq
    %v607 = vshrl.u32 %v606, 7
    %v608 = vsub.s32 5, %v607
    %v609 = vrot.slane %v55, %v608
    %v610 = vlaneseq
    %v611 = vshrl.u32 %v610, 7
    %v612 = vsub.s32 1, %v611
    %v613 = vrot.slane %v56, %v612
    %v614 = vlaneseq
    %v615 = vshrl.u32 %v614, 7
    %v616 = vsub.s32 5, %v615
    %v617 = vrot.slane %v56, %v616
    %v618 = vlaneseq
    %v619 = vshrl.u32 %v618, 7
    %v620 = vsub.s32 1, %v619
    %v621 = vrot.slane %v57, %v620
    %v622 = vlaneseq
    %v623 = vshrl.u32 %v622, 7
    %v624 = vsub.s32 5, %v623
    %v625 = vrot.slane %v57, %v624
    %v626 = vlaneseq
    %v627 = vshrl.u32 %v626, 7
    %v628 = vsub.s32 1, %v627
    %v629 = vrot.slane %v58, %v628
    %v630 = vlaneseq
    %v631 = vshrl.u32 %v630, 7
    %v632 = vsub.s32 5, %v631
    %v633 = vrot.slane %v58, %v632
    %v634 = vlaneseq
    %v635 = vshrl.u32 %v634, 7
    %v636 = vsub.s32 1, %v635
    %v637 = vrot.slane %v59, %v636
    %v638 = vlaneseq
    %v639 = vshrl.u32 %v638, 7
    %v640 = vsub.s32 5, %v639
    %v641 = vrot.slane %v59, %v640
    %v642 = vlaneseq
    %v643 = vshrl.u32 %v642, 7
    %v644 = vsub.s32 1, %v643
    %v645 = vrot.slane %v60, %v644
    %v646 = vlaneseq
    %v647 = vshrl.u32 %v646, 7
    %v648 = vsub.s32 5, %v647
    %v649 = vrot.slane %v60, %v648
    %v666 = vlaneseq
    %v667 = vshrl.u32 %v666, 7
    %v668 = vsub.s32 1, %v667
    %v669 = vrot.slane %v589, %v668
    %v670 = vlaneseq
    %v671 = vshrl.u32 %v670, 7
    %v672 = vsub.s32 1, %v671
    %v673 = vrot.slane %v593, %v672
    %v674 = vlaneseq
    %v675 = vshrl.u32 %v674, 7
    %v676 = vsub.s32 1, %v675
    %v677 = vrot.slane %v597, %v676
    %v678 = vlaneseq
    %v679 = vshrl.u32 %v678, 7
    %v680 = vsub.s32 1, %v679
    %v681 = vrot.slane %v601, %v680
    %v682 = vlaneseq
    %v683 = vshrl.u32 %v682, 7
    %v684 = vsub.s32 1, %v683
    %v685 = vrot.slane %v605, %v684
    %v686 = vlaneseq
    %v687 = vshrl.u32 %v686, 7
    %v688 = vsub.s32 1, %v687
    %v689 = vrot.slane %v609, %v688
    %v690 = vlaneseq
    %v691 = vshrl.u32 %v690, 7
    %v692 = vsub.s32 1, %v691
    %v693 = vrot.slane %v613, %v692
    %v694 = vlaneseq
    %v695 = vshrl.u32 %v694, 7
    %v696 = vsub.s32 1, %v695
    %v697 = vrot.slane %v617, %v696
    %v698 = vlaneseq
    %v699 = vshrl.u32 %v698, 7
    %v700 = vsub.s32 1, %v699
    %v701 = vrot.slane %v621, %v700
    %v702 = vlaneseq
    %v703 = vshrl.u32 %v702, 7
    %v704 = vsub.s32 1, %v703
    %v705 = vrot.slane %v625, %v704
    %v706 = vlaneseq
    %v707 = vshrl.u32 %v706, 7
    %v708 = vsub.s32 1, %v707
    %v709 = vrot.slane %v629, %v708
    %v710 = vlaneseq
    %v711 = vshrl.u32 %v710, 7
    %v712 = vsub.s32 1, %v711
    %v713 = vrot.slane %v633, %v712
    %v714 = vlaneseq
    %v715 = vshrl.u32 %v714, 7
    %v716 = vsub.s32 1, %v715
    %v717 = vrot.slane %v637, %v716
    %v718 = vlaneseq
    %v719 = vshrl.u32 %v718, 7
    %v720 = vsub.s32 1, %v719
    %v721 = vrot.slane %v641, %v720
    %v722 = vlaneseq
    %v723 = vshrl.u32 %v722, 7
    %v724 = vsub.s32 1, %v723
    %v725 = vrot.slane %v645, %v724
    %v726 = vlaneseq
    %v727 = vshrl.u32 %v726, 7
    %v728 = vsub.s32 1, %v727
    %v729 = vrot.slane %v649, %v728
    %v746 = vcombine.low %v669, %v673
    %v747 = vcombine.low %v677, %v681
    %v749 = vunpack.c.l.s4 1983009808
    %v750 = vunpack.c.0.s8 %v749
    %v751 = vlaneseq
    %v752 = vshrl.u32 %v751, 7
    %v753 = vsub.s32 %v750, %v752
    %v754 = vrot.slane %v746, %v753
    %v756 = vunpack.c.l.s4 1983009808
    %v757 = vunpack.c.0.s8 %v756
    %v758 = vlaneseq
    %v759 = vshrl.u32 %v758, 7
    %v760 = vsub.s32 %v757, %v759
    %v761 = vrot.slane %v747, %v760
    %v762 = vcombine.low %v754, %v761
    %v763 = vcombine.low %v685, %v689
    %v764 = vcombine.low %v693, %v697
    %v766 = vunpack.c.l.s4 1983009808
    %v767 = vunpack.c.0.s8 %v766
    %v768 = vlaneseq
    %v769 = vshrl.u32 %v768, 7
    %v770 = vsub.s32 %v767, %v769
    %v771 = vrot.slane %v763, %v770
    %v773 = vunpack.c.l.s4 1983009808
    %v774 = vunpack.c.0.s8 %v773
    %v775 = vlaneseq
    %v776 = vshrl.u32 %v775, 7
    %v777 = vsub.s32 %v774, %v776
    %v778 = vrot.slane %v764, %v777
    %v779 = vcombine.low %v771, %v778
    %v780 = vcombine.low %v701, %v705
    %v781 = vcombine.low %v709, %v713
    %v783 = vunpack.c.l.s4 1983009808
    %v784 = vunpack.c.0.s8 %v783
    %v785 = vlaneseq
    %v786 = vshrl.u32 %v785, 7
    %v787 = vsub.s32 %v784, %v786
    %v788 = vrot.slane %v780, %v787
    %v790 = vunpack.c.l.s4 1983009808
    %v791 = vunpack.c.0.s8 %v790
    %v792 = vlaneseq
    %v793 = vshrl.u32 %v792, 7
    %v794 = vsub.s32 %v791, %v793
    %v795 = vrot.slane %v781, %v794
    %v796 = vcombine.low %v788, %v795
    %v797 = vcombine.low %v717, %v721
    %v798 = vcombine.low %v725, %v729
    %v800 = vunpack.c.l.s4 1983009808
    %v801 = vunpack.c.0.s8 %v800
    %v802 = vlaneseq
    %v803 = vshrl.u32 %v802, 7
    %v804 = vsub.s32 %v801, %v803
    %v805 = vrot.slane %v797, %v804
    %v807 = vunpack.c.l.s4 1983009808
    %v808 = vunpack.c.0.s8 %v807
    %v809 = vlaneseq
    %v810 = vshrl.u32 %v809, 7
    %v811 = vsub.s32 %v808, %v810
    %v812 = vrot.slane %v798, %v811
    %v813 = vcombine.low %v805, %v812
    %v818 = vadd.f32 %v582, %v762
    %v819 = vadd.f32 %v583, %v779
    %v820 = vadd.f32 %v584, %v796
    %v821 = vadd.f32 %v585, %v813
    %822 = vst [vmem:[#allocation8] sm:$0xff] %v818
    %823 = vst [vmem:[#allocation8 + $0x8] sm:$0xff] %v819
    %824 = vst [vmem:[#allocation8 + $0x10] sm:$0xff] %v820
    %825 = vst [vmem:[#allocation8 + $0x18] sm:$0xff] %v821
    %v826 = vld [vmem:[#allocation5] sm:$0xff]
    %v827 = vld [vmem:[#allocation5 + $0x8] sm:$0xff]
    %v828 = vld [vmem:[#allocation5 + $0x10] sm:$0xff]
    %v829 = vld [vmem:[#allocation5 + $0x18] sm:$0xff]
    %v834 = vcombine.high %v826, %v826
    %v836 = vunpack.c.l.s4 1983009808
    %v837 = vunpack.c.0.s8 %v836
    %v838 = vlaneseq
    %v839 = vshrl.u32 %v838, 7
    %v840 = vsub.s32 %v837, %v839
    %v841 = vrot.slane %v826, %v840
    %v843 = vunpack.c.l.s4 1983009808
    %v844 = vunpack.c.0.s8 %v843
    %v845 = vlaneseq
    %v846 = vshrl.u32 %v845, 7
    %v847 = vsub.s32 %v844, %v846
    %v848 = vrot.slane %v834, %v847
    %v849 = vcombine.high %v841, %v841
    %v850 = vcombine.high %v848, %v848
    %v851 = vcombine.high %v827, %v827
    %v853 = vunpack.c.l.s4 1983009808
    %v854 = vunpack.c.0.s8 %v853
    %v855 = vlaneseq
    %v856 = vshrl.u32 %v855, 7
    %v857 = vsub.s32 %v854, %v856
    %v858 = vrot.slane %v827, %v857
    %v860 = vunpack.c.l.s4 1983009808
    %v861 = vunpack.c.0.s8 %v860
    %v862 = vlaneseq
    %v863 = vshrl.u32 %v862, 7
    %v864 = vsub.s32 %v861, %v863
    %v865 = vrot.slane %v851, %v864
    %v866 = vcombine.high %v858, %v858
    %v867 = vcombine.high %v865, %v865
    %v868 = vcombine.high %v828, %v828
    %v870 = vunpack.c.l.s4 1983009808
    %v871 = vunpack.c.0.s8 %v870
    %v872 = vlaneseq
    %v873 = vshrl.u32 %v872, 7
    %v874 = vsub.s32 %v871, %v873
    %v875 = vrot.slane %v828, %v874
    %v877 = vunpack.c.l.s4 1983009808
    %v878 = vunpack.c.0.s8 %v877
    %v879 = vlaneseq
    %v880 = vshrl.u32 %v879, 7
    %v881 = vsub.s32 %v878, %v880
    %v882 = vrot.slane %v868, %v881
    %v883 = vcombine.high %v875, %v875
    %v884 = vcombine.high %v882, %v882
    %v885 = vcombine.high %v829, %v829
    %v887 = vunpack.c.l.s4 1983009808
    %v888 = vunpack.c.0.s8 %v887
    %v889 = vlaneseq
    %v890 = vshrl.u32 %v889, 7
    %v891 = vsub.s32 %v888, %v890
    %v892 = vrot.slane %v829, %v891
    %v894 = vunpack.c.l.s4 1983009808
    %v895 = vunpack.c.0.s8 %v894
    %v896 = vlaneseq
    %v897 = vshrl.u32 %v896, 7
    %v898 = vsub.s32 %v895, %v897
    %v899 = vrot.slane %v885, %v898
    %v900 = vcombine.high %v892, %v892
    %v901 = vcombine.high %v899, %v899
    %v918 = vsel %vm153, %v841, 0.0
    %v919 = vsel %vm153, %v849, 0.0
    %v920 = vadd.f32 %v918, %v919
    %v921 = vsel %vm153, %v848, 0.0
    %v922 = vadd.f32 %v920, %v921
    %v923 = vsel %vm153, %v850, 0.0
    %v924 = vadd.f32 %v922, %v923
    %v925 = vsel %vm153, %v858, 0.0
    %v926 = vadd.f32 %v924, %v925
    %v927 = vsel %vm153, %v866, 0.0
    %v928 = vadd.f32 %v926, %v927
    %v929 = vsel %vm153, %v865, 0.0
    %v930 = vadd.f32 %v928, %v929
    %v931 = vsel %vm153, %v867, 0.0
    %v932 = vadd.f32 %v930, %v931
    %v933 = vsel %vm153, %v875, 0.0
    %v934 = vadd.f32 %v932, %v933
    %v935 = vsel %vm153, %v883, 0.0
    %v936 = vadd.f32 %v934, %v935
    %v937 = vsel %vm153, %v882, 0.0
    %v938 = vadd.f32 %v936, %v937
    %v939 = vsel %vm153, %v884, 0.0
    %v940 = vadd.f32 %v938, %v939
    %v941 = vsel %vm153, %v892, 0.0
    %v942 = vadd.f32 %v940, %v941
    %v943 = vsel %vm153, %v900, 0.0
    %v944 = vadd.f32 %v942, %v943
    %v945 = vsel %vm153, %v899, 0.0
    %v946 = vadd.f32 %v944, %v945
    %v947 = vsel %vm153, %v901, 0.0
    %v948 = vadd.f32 %v946, %v947
    %949 = vadd.xlane.f32.xlu0 %v948
    %v950 = vpop.xlane.xlu0 %949
    %v951 = vmul.f32 %v950, 0.00048828125
    %v954 = vunpack.c.l.s4 269488144
    %v955 = vunpack.c.0.s8 %v954
    %v956 = vlaneseq
    %v957 = vshrl.u32 %v956, 7
    %v958 = vsub.s32 %v955, %v957
    %v959 = vrot.slane %v951, %v958
    %v961 = vsub.f32 %v826, %v959
    %v962 = vsub.f32 %v827, %v959
    %v963 = vsub.f32 %v828, %v959
    %v964 = vsub.f32 %v829, %v959
    %v965 = vmul.f32 %v961, %v961
    %v966 = vmul.f32 %v962, %v962
    %v967 = vmul.f32 %v963, %v963
    %v968 = vmul.f32 %v964, %v964
    %v973 = vcombine.high %v965, %v965
    %v975 = vunpack.c.l.s4 1983009808
    %v976 = vunpack.c.0.s8 %v975
    %v977 = vlaneseq
    %v978 = vshrl.u32 %v977, 7
    %v979 = vsub.s32 %v976, %v978
    %v980 = vrot.slane %v965, %v979
    %v982 = vunpack.c.l.s4 1983009808
    %v983 = vunpack.c.0.s8 %v982
    %v984 = vlaneseq
    %v985 = vshrl.u32 %v984, 7
    %v986 = vsub.s32 %v983, %v985
    %v987 = vrot.slane %v973, %v986
    %v988 = vcombine.high %v980, %v980
    %v989 = vcombine.high %v987, %v987
    %v990 = vcombine.high %v966, %v966
    %v992 = vunpack.c.l.s4 1983009808
    %v993 = vunpack.c.0.s8 %v992
    %v994 = vlaneseq
    %v995 = vshrl.u32 %v994, 7
    %v996 = vsub.s32 %v993, %v995
    %v997 = vrot.slane %v966, %v996
    %v999 = vunpack.c.l.s4 1983009808
    %v1000 = vunpack.c.0.s8 %v999
    %v1001 = vlaneseq
    %v1002 = vshrl.u32 %v1001, 7
    %v1003 = vsub.s32 %v1000, %v1002
    %v1004 = vrot.slane %v990, %v1003
    %v1005 = vcombine.high %v997, %v997
    %v1006 = vcombine.high %v1004, %v1004
    %v1007 = vcombine.high %v967, %v967
    %v1009 = vunpack.c.l.s4 1983009808
    %v1010 = vunpack.c.0.s8 %v1009
    %v1011 = vlaneseq
    %v1012 = vshrl.u32 %v1011, 7
    %v1013 = vsub.s32 %v1010, %v1012
    %v1014 = vrot.slane %v967, %v1013
    %v1016 = vunpack.c.l.s4 1983009808
    %v1017 = vunpack.c.0.s8 %v1016
    %v1018 = vlaneseq
    %v1019 = vshrl.u32 %v1018, 7
    %v1020 = vsub.s32 %v1017, %v1019
    %v1021 = vrot.slane %v1007, %v1020
    %v1022 = vcombine.high %v1014, %v1014
    %v1023 = vcombine.high %v1021, %v1021
    %v1024 = vcombine.high %v968, %v968
    %v1026 = vunpack.c.l.s4 1983009808
    %v1027 = vunpack.c.0.s8 %v1026
    %v1028 = vlaneseq
    %v1029 = vshrl.u32 %v1028, 7
    %v1030 = vsub.s32 %v1027, %v1029
    %v1031 = vrot.slane %v968, %v1030
    %v1033 = vunpack.c.l.s4 1983009808
    %v1034 = vunpack.c.0.s8 %v1033
    %v1035 = vlaneseq
    %v1036 = vshrl.u32 %v1035, 7
    %v1037 = vsub.s32 %v1034, %v1036
    %v1038 = vrot.slane %v1024, %v1037
    %v1039 = vcombine.high %v1031, %v1031
    %v1040 = vcombine.high %v1038, %v1038
    %v1057 = vsel %vm153, %v980, 0.0
    %v1058 = vsel %vm153, %v988, 0.0
    %v1059 = vadd.f32 %v1057, %v1058
    %v1060 = vsel %vm153, %v987, 0.0
    %v1061 = vadd.f32 %v1059, %v1060
    %v1062 = vsel %vm153, %v989, 0.0
    %v1063 = vadd.f32 %v1061, %v1062
    %v1064 = vsel %vm153, %v997, 0.0
    %v1065 = vadd.f32 %v1063, %v1064
    %v1066 = vsel %vm153, %v1005, 0.0
    %v1067 = vadd.f32 %v1065, %v1066
    %v1068 = vsel %vm153, %v1004, 0.0
    %v1069 = vadd.f32 %v1067, %v1068
    %v1070 = vsel %vm153, %v1006, 0.0
    %v1071 = vadd.f32 %v1069, %v1070
    %v1072 = vsel %vm153, %v1014, 0.0
    %v1073 = vadd.f32 %v1071, %v1072
    %v1074 = vsel %vm153, %v1022, 0.0
    %v1075 = vadd.f32 %v1073, %v1074
    %v1076 = vsel %vm153, %v1021, 0.0
    %v1077 = vadd.f32 %v1075, %v1076
    %v1078 = vsel %vm153, %v1023, 0.0
    %v1079 = vadd.f32 %v1077, %v1078
    %v1080 = vsel %vm153, %v1031, 0.0
    %v1081 = vadd.f32 %v1079, %v1080
    %v1082 = vsel %vm153, %v1039, 0.0
    %v1083 = vadd.f32 %v1081, %v1082
    %v1084 = vsel %vm153, %v1038, 0.0
    %v1085 = vadd.f32 %v1083, %v1084
    %v1086 = vsel %vm153, %v1040, 0.0
    %v1087 = vadd.f32 %v1085, %v1086
    %1088 = vadd.xlane.f32.xlu0 %v1087
    %v1089 = vpop.xlane.xlu0 %1088
    %v1090 = vmul.f32 %v1089, 0.00048828125
    %v1091 = vadd.f32 %v1090, 1e-05
    %v1092 = vrsqrt.pop %v1091
    %v1095 = vunpack.c.l.s4 269488144
    %v1096 = vunpack.c.0.s8 %v1095
    %v1097 = vlaneseq
    %v1098 = vshrl.u32 %v1097, 7
    %v1099 = vsub.s32 %v1096, %v1098
    %v1100 = vrot.slane %v1092, %v1099
    %v1102 = vmul.f32 %v961, %v1100
    %v1103 = vmul.f32 %v962, %v1100
    %v1104 = vmul.f32 %v963, %v1100
    %v1105 = vmul.f32 %v964, %v1100
    %v1106 = vlaneseq
    %v1107 = vshrl.u32 %v1106, 7
    %v1108 = vsub.s32 2, %v1107
    %v1109 = vrot.slane %v53, %v1108
    %v1110 = vlaneseq
    %v1111 = vshrl.u32 %v1110, 7
    %v1112 = vsub.s32 6, %v1111
    %v1113 = vrot.slane %v53, %v1112
    %v1114 = vlaneseq
    %v1115 = vshrl.u32 %v1114, 7
    %v1116 = vsub.s32 2, %v1115
    %v1117 = vrot.slane %v54, %v1116
    %v1118 = vlaneseq
    %v1119 = vshrl.u32 %v1118, 7
    %v1120 = vsub.s32 6, %v1119
    %v1121 = vrot.slane %v54, %v1120
    %v1122 = vlaneseq
    %v1123 = vshrl.u32 %v1122, 7
    %v1124 = vsub.s32 2, %v1123
    %v1125 = vrot.slane %v55, %v1124
    %v1126 = vlaneseq
    %v1127 = vshrl.u32 %v1126, 7
    %v1128 = vsub.s32 6, %v1127
    %v1129 = vrot.slane %v55, %v1128
    %v1130 = vlaneseq
    %v1131 = vshrl.u32 %v1130, 7
    %v1132 = vsub.s32 2, %v1131
    %v1133 = vrot.slane %v56, %v1132
    %v1134 = vlaneseq
    %v1135 = vshrl.u32 %v1134, 7
    %v1136 = vsub.s32 6, %v1135
    %v1137 = vrot.slane %v56, %v1136
    %v1138 = vlaneseq
    %v1139 = vshrl.u32 %v1138, 7
    %v1140 = vsub.s32 2, %v1139
    %v1141 = vrot.slane %v57, %v1140
    %v1142 = vlaneseq
    %v1143 = vshrl.u32 %v1142, 7
    %v1144 = vsub.s32 6, %v1143
    %v1145 = vrot.slane %v57, %v1144
    %v1146 = vlaneseq
    %v1147 = vshrl.u32 %v1146, 7
    %v1148 = vsub.s32 2, %v1147
    %v1149 = vrot.slane %v58, %v1148
    %v1150 = vlaneseq
    %v1151 = vshrl.u32 %v1150, 7
    %v1152 = vsub.s32 6, %v1151
    %v1153 = vrot.slane %v58, %v1152
    %v1154 = vlaneseq
    %v1155 = vshrl.u32 %v1154, 7
    %v1156 = vsub.s32 2, %v1155
    %v1157 = vrot.slane %v59, %v1156
    %v1158 = vlaneseq
    %v1159 = vshrl.u32 %v1158, 7
    %v1160 = vsub.s32 6, %v1159
    %v1161 = vrot.slane %v59, %v1160
    %v1162 = vlaneseq
    %v1163 = vshrl.u32 %v1162, 7
    %v1164 = vsub.s32 2, %v1163
    %v1165 = vrot.slane %v60, %v1164
    %v1166 = vlaneseq
    %v1167 = vshrl.u32 %v1166, 7
    %v1168 = vsub.s32 6, %v1167
    %v1169 = vrot.slane %v60, %v1168
    %v1186 = vlaneseq
    %v1187 = vshrl.u32 %v1186, 7
    %v1188 = vsub.s32 2, %v1187
    %v1189 = vrot.slane %v1109, %v1188
    %v1190 = vlaneseq
    %v1191 = vshrl.u32 %v1190, 7
    %v1192 = vsub.s32 2, %v1191
    %v1193 = vrot.slane %v1113, %v1192
    %v1194 = vlaneseq
    %v1195 = vshrl.u32 %v1194, 7
    %v1196 = vsub.s32 2, %v1195
    %v1197 = vrot.slane %v1117, %v1196
    %v1198 = vlaneseq
    %v1199 = vshrl.u32 %v1198, 7
    %v1200 = vsub.s32 2, %v1199
    %v1201 = vrot.slane %v1121, %v1200
    %v1202 = vlaneseq
    %v1203 = vshrl.u32 %v1202, 7
    %v1204 = vsub.s32 2, %v1203
    %v1205 = vrot.slane %v1125, %v1204
    %v1206 = vlaneseq
    %v1207 = vshrl.u32 %v1206, 7
    %v1208 = vsub.s32 2, %v1207
    %v1209 = vrot.slane %v1129, %v1208
    %v1210 = vlaneseq
    %v1211 = vshrl.u32 %v1210, 7
    %v1212 = vsub.s32 2, %v1211
    %v1213 = vrot.slane %v1133, %v1212
    %v1214 = vlaneseq
    %v1215 = vshrl.u32 %v1214, 7
    %v1216 = vsub.s32 2, %v1215
    %v1217 = vrot.slane %v1137, %v1216
    %v1218 = vlaneseq
    %v1219 = vshrl.u32 %v1218, 7
    %v1220 = vsub.s32 2, %v1219
    %v1221 = vrot.slane %v1141, %v1220
    %v1222 = vlaneseq
    %v1223 = vshrl.u32 %v1222, 7
    %v1224 = vsub.s32 2, %v1223
    %v1225 = vrot.slane %v1145, %v1224
    %v1226 = vlaneseq
    %v1227 = vshrl.u32 %v1226, 7
    %v1228 = vsub.s32 2, %v1227
    %v1229 = vrot.slane %v1149, %v1228
    %v1230 = vlaneseq
    %v1231 = vshrl.u32 %v1230, 7
    %v1232 = vsub.s32 2, %v1231
    %v1233 = vrot.slane %v1153, %v1232
    %v1234 = vlaneseq
    %v1235 = vshrl.u32 %v1234, 7
    %v1236 = vsub.s32 2, %v1235
    %v1237 = vrot.slane %v1157, %v1236
    %v1238 = vlaneseq
    %v1239 = vshrl.u32 %v1238, 7
    %v1240 = vsub.s32 2, %v1239
    %v1241 = vrot.slane %v1161, %v1240
    %v1242 = vlaneseq
    %v1243 = vshrl.u32 %v1242, 7
    %v1244 = vsub.s32 2, %v1243
    %v1245 = vrot.slane %v1165, %v1244
    %v1246 = vlaneseq
    %v1247 = vshrl.u32 %v1246, 7
    %v1248 = vsub.s32 2, %v1247
    %v1249 = vrot.slane %v1169, %v1248
    %v1266 = vcombine.low %v1189, %v1193
    %v1267 = vcombine.low %v1197, %v1201
    %v1269 = vunpack.c.l.s4 1983009808
    %v1270 = vunpack.c.0.s8 %v1269
    %v1271 = vlaneseq
    %v1272 = vshrl.u32 %v1271, 7
    %v1273 = vsub.s32 %v1270, %v1272
    %v1274 = vrot.slane %v1266, %v1273
    %v1276 = vunpack.c.l.s4 1983009808
    %v1277 = vunpack.c.0.s8 %v1276
    %v1278 = vlaneseq
    %v1279 = vshrl.u32 %v1278, 7
    %v1280 = vsub.s32 %v1277, %v1279
    %v1281 = vrot.slane %v1267, %v1280
    %v1282 = vcombine.low %v1274, %v1281
    %v1283 = vcombine.low %v1205, %v1209
    %v1284 = vcombine.low %v1213, %v1217
    %v1286 = vunpack.c.l.s4 1983009808
    %v1287 = vunpack.c.0.s8 %v1286
    %v1288 = vlaneseq
    %v1289 = vshrl.u32 %v1288, 7
    %v1290 = vsub.s32 %v1287, %v1289
    %v1291 = vrot.slane %v1283, %v1290
    %v1293 = vunpack.c.l.s4 1983009808
    %v1294 = vunpack.c.0.s8 %v1293
    %v1295 = vlaneseq
    %v1296 = vshrl.u32 %v1295, 7
    %v1297 = vsub.s32 %v1294, %v1296
    %v1298 = vrot.slane %v1284, %v1297
    %v1299 = vcombine.low %v1291, %v1298
    %v1300 = vcombine.low %v1221, %v1225
    %v1301 = vcombine.low %v1229, %v1233
    %v1303 = vunpack.c.l.s4 1983009808
    %v1304 = vunpack.c.0.s8 %v1303
    %v1305 = vlaneseq
    %v1306 = vshrl.u32 %v1305, 7
    %v1307 = vsub.s32 %v1304, %v1306
    %v1308 = vrot.slane %v1300, %v1307
    %v1310 = vunpack.c.l.s4 1983009808
    %v1311 = vunpack.c.0.s8 %v1310
    %v1312 = vlaneseq
    %v1313 = vshrl.u32 %v1312, 7
    %v1314 = vsub.s32 %v1311, %v1313
    %v1315 = vrot.slane %v1301, %v1314
    %v1316 = vcombine.low %v1308, %v1315
    %v1317 = vcombine.low %v1237, %v1241
    %v1318 = vcombine.low %v1245, %v1249
    %v1320 = vunpack.c.l.s4 1983009808
    %v1321 = vunpack.c.0.s8 %v1320
    %v1322 = vlaneseq
    %v1323 = vshrl.u32 %v1322, 7
    %v1324 = vsub.s32 %v1321, %v1323
    %v1325 = vrot.slane %v1317, %v1324
    %v1327 = vunpack.c.l.s4 1983009808
    %v1328 = vunpack.c.0.s8 %v1327
    %v1329 = vlaneseq
    %v1330 = vshrl.u32 %v1329, 7
    %v1331 = vsub.s32 %v1328, %v1330
    %v1332 = vrot.slane %v1318, %v1331
    %v1333 = vcombine.low %v1325, %v1332
    %v1338 = vmul.f32 %v1102, %v1282
    %v1339 = vmul.f32 %v1103, %v1299
    %v1340 = vmul.f32 %v1104, %v1316
    %v1341 = vmul.f32 %v1105, %v1333
    %v1342 = vlaneseq
    %v1343 = vshrl.u32 %v1342, 7
    %v1344 = vsub.s32 3, %v1343
    %v1345 = vrot.slane %v53, %v1344
    %v1346 = vlaneseq
    %v1347 = vshrl.u32 %v1346, 7
    %v1348 = vsub.s32 7, %v1347
    %v1349 = vrot.slane %v53, %v1348
    %v1350 = vlaneseq
    %v1351 = vshrl.u32 %v1350, 7
    %v1352 = vsub.s32 3, %v1351
    %v1353 = vrot.slane %v54, %v1352
    %v1354 = vlaneseq
    %v1355 = vshrl.u32 %v1354, 7
    %v1356 = vsub.s32 7, %v1355
    %v1357 = vrot.slane %v54, %v1356
    %v1358 = vlaneseq
    %v1359 = vshrl.u32 %v1358, 7
    %v1360 = vsub.s32 3, %v1359
    %v1361 = vrot.slane %v55, %v1360
    %v1362 = vlaneseq
    %v1363 = vshrl.u32 %v1362, 7
    %v1364 = vsub.s32 7, %v1363
    %v1365 = vrot.slane %v55, %v1364
    %v1366 = vlaneseq
    %v1367 = vshrl.u32 %v1366, 7
    %v1368 = vsub.s32 3, %v1367
    %v1369 = vrot.slane %v56, %v1368
    %v1370 = vlaneseq
    %v1371 = vshrl.u32 %v1370, 7
    %v1372 = vsub.s32 7, %v1371
    %v1373 = vrot.slane %v56, %v1372
    %v1374 = vlaneseq
    %v1375 = vshrl.u32 %v1374, 7
    %v1376 = vsub.s32 3, %v1375
    %v1377 = vrot.slane %v57, %v1376
    %v1378 = vlaneseq
    %v1379 = vshrl.u32 %v1378, 7
    %v1380 = vsub.s32 7, %v1379
    %v1381 = vrot.slane %v57, %v1380
    %v1382 = vlaneseq
    %v1383 = vshrl.u32 %v1382, 7
    %v1384 = vsub.s32 3, %v1383
    %v1385 = vrot.slane %v58, %v1384
    %v1386 = vlaneseq
    %v1387 = vshrl.u32 %v1386, 7
    %v1388 = vsub.s32 7, %v1387
    %v1389 = vrot.slane %v58, %v1388
    %v1390 = vlaneseq
    %v1391 = vshrl.u32 %v1390, 7
    %v1392 = vsub.s32 3, %v1391
    %v1393 = vrot.slane %v59, %v1392
    %v1394 = vlaneseq
    %v1395 = vshrl.u32 %v1394, 7
    %v1396 = vsub.s32 7, %v1395
    %v1397 = vrot.slane %v59, %v1396
    %v1398 = vlaneseq
    %v1399 = vshrl.u32 %v1398, 7
    %v1400 = vsub.s32 3, %v1399
    %v1401 = vrot.slane %v60, %v1400
    %v1402 = vlaneseq
    %v1403 = vshrl.u32 %v1402, 7
    %v1404 = vsub.s32 7, %v1403
    %v1405 = vrot.slane %v60, %v1404
    %v1422 = vlaneseq
    %v1423 = vshrl.u32 %v1422, 7
    %v1424 = vsub.s32 3, %v1423
    %v1425 = vrot.slane %v1345, %v1424
    %v1426 = vlaneseq
    %v1427 = vshrl.u32 %v1426, 7
    %v1428 = vsub.s32 3, %v1427
    %v1429 = vrot.slane %v1349, %v1428
    %v1430 = vlaneseq
    %v1431 = vshrl.u32 %v1430, 7
    %v1432 = vsub.s32 3, %v1431
    %v1433 = vrot.slane %v1353, %v1432
    %v1434 = vlaneseq
    %v1435 = vshrl.u32 %v1434, 7
    %v1436 = vsub.s32 3, %v1435
    %v1437 = vrot.slane %v1357, %v1436
    %v1438 = vlaneseq
    %v1439 = vshrl.u32 %v1438, 7
    %v1440 = vsub.s32 3, %v1439
    %v1441 = vrot.slane %v1361, %v1440
    %v1442 = vlaneseq
    %v1443 = vshrl.u32 %v1442, 7
    %v1444 = vsub.s32 3, %v1443
    %v1445 = vrot.slane %v1365, %v1444
    %v1446 = vlaneseq
    %v1447 = vshrl.u32 %v1446, 7
    %v1448 = vsub.s32 3, %v1447
    %v1449 = vrot.slane %v1369, %v1448
    %v1450 = vlaneseq
    %v1451 = vshrl.u32 %v1450, 7
    %v1452 = vsub.s32 3, %v1451
    %v1453 = vrot.slane %v1373, %v1452
    %v1454 = vlaneseq
    %v1455 = vshrl.u32 %v1454, 7
    %v1456 = vsub.s32 3, %v1455
    %v1457 = vrot.slane %v1377, %v1456
    %v1458 = vlaneseq
    %v1459 = vshrl.u32 %v1458, 7
    %v1460 = vsub.s32 3, %v1459
    %v1461 = vrot.slane %v1381, %v1460
    %v1462 = vlaneseq
    %v1463 = vshrl.u32 %v1462, 7
    %v1464 = vsub.s32 3, %v1463
    %v1465 = vrot.slane %v1385, %v1464
    %v1466 = vlaneseq
    %v1467 = vshrl.u32 %v1466, 7
    %v1468 = vsub.s32 3, %v1467
    %v1469 = vrot.slane %v1389, %v1468
    %v1470 = vlaneseq
    %v1471 = vshrl.u32 %v1470, 7
    %v1472 = vsub.s32 3, %v1471
    %v1473 = vrot.slane %v1393, %v1472
    %v1474 = vlaneseq
    %v1475 = vshrl.u32 %v1474, 7
    %v1476 = vsub.s32 3, %v1475
    %v1477 = vrot.slane %v1397, %v1476
    %v1478 = vlaneseq
    %v1479 = vshrl.u32 %v1478, 7
    %v1480 = vsub.s32 3, %v1479
    %v1481 = vrot.slane %v1401, %v1480
    %v1482 = vlaneseq
    %v1483 = vshrl.u32 %v1482, 7
    %v1484 = vsub.s32 3, %v1483
    %v1485 = vrot.slane %v1405, %v1484
    %v1502 = vcombine.low %v1425, %v1429
    %v1503 = vcombine.low %v1433, %v1437
    %v1505 = vunpack.c.l.s4 1983009808
    %v1506 = vunpack.c.0.s8 %v1505
    %v1507 = vlaneseq
    %v1508 = vshrl.u32 %v1507, 7
    %v1509 = vsub.s32 %v1506, %v1508
    %v1510 = vrot.slane %v1502, %v1509
    %v1512 = vunpack.c.l.s4 1983009808
    %v1513 = vunpack.c.0.s8 %v1512
    %v1514 = vlaneseq
    %v1515 = vshrl.u32 %v1514, 7
    %v1516 = vsub.s32 %v1513, %v1515
    %v1517 = vrot.slane %v1503, %v1516
    %v1518 = vcombine.low %v1510, %v1517
    %v1519 = vcombine.low %v1441, %v1445
    %v1520 = vcombine.low %v1449, %v1453
    %v1522 = vunpack.c.l.s4 1983009808
    %v1523 = vunpack.c.0.s8 %v1522
    %v1524 = vlaneseq
    %v1525 = vshrl.u32 %v1524, 7
    %v1526 = vsub.s32 %v1523, %v1525
    %v1527 = vrot.slane %v1519, %v1526
    %v1529 = vunpack.c.l.s4 1983009808
    %v1530 = vunpack.c.0.s8 %v1529
    %v1531 = vlaneseq
    %v1532 = vshrl.u32 %v1531, 7
    %v1533 = vsub.s32 %v1530, %v1532
    %v1534 = vrot.slane %v1520, %v1533
    %v1535 = vcombine.low %v1527, %v1534
    %v1536 = vcombine.low %v1457, %v1461
    %v1537 = vcombine.low %v1465, %v1469
    %v1539 = vunpack.c.l.s4 1983009808
    %v1540 = vunpack.c.0.s8 %v1539
    %v1541 = vlaneseq
    %v1542 = vshrl.u32 %v1541, 7
    %v1543 = vsub.s32 %v1540, %v1542
    %v1544 = vrot.slane %v1536, %v1543
    %v1546 = vunpack.c.l.s4 1983009808
    %v1547 = vunpack.c.0.s8 %v1546
    %v1548 = vlaneseq
    %v1549 = vshrl.u32 %v1548, 7
    %v1550 = vsub.s32 %v1547, %v1549
    %v1551 = vrot.slane %v1537, %v1550
    %v1552 = vcombine.low %v1544, %v1551
    %v1553 = vcombine.low %v1473, %v1477
    %v1554 = vcombine.low %v1481, %v1485
    %v1556 = vunpack.c.l.s4 1983009808
    %v1557 = vunpack.c.0.s8 %v1556
    %v1558 = vlaneseq
    %v1559 = vshrl.u32 %v1558, 7
    %v1560 = vsub.s32 %v1557, %v1559
    %v1561 = vrot.slane %v1553, %v1560
    %v1563 = vunpack.c.l.s4 1983009808
    %v1564 = vunpack.c.0.s8 %v1563
    %v1565 = vlaneseq
    %v1566 = vshrl.u32 %v1565, 7
    %v1567 = vsub.s32 %v1564, %v1566
    %v1568 = vrot.slane %v1554, %v1567
    %v1569 = vcombine.low %v1561, %v1568
    %v1574 = vadd.f32 %v1338, %v1518
    %v1575 = vadd.f32 %v1339, %v1535
    %v1576 = vadd.f32 %v1340, %v1552
    %v1577 = vadd.f32 %v1341, %v1569
    %1578 = vst [vmem:[#allocation9] sm:$0xff] %v1574
    %1579 = vst [vmem:[#allocation9 + $0x8] sm:$0xff] %v1575
    %1580 = vst [vmem:[#allocation9 + $0x10] sm:$0xff] %v1576
    %1581 = vst [vmem:[#allocation9 + $0x18] sm:$0xff] %v1577
    // Predicated region
    $region26: #{tpu_custom_call.1} parent=1 // pred_check
      _
    $region27: #{tpu_custom_call.1} parent=1 // pred_check_branch
      %1583 = sbr.rel (0) target = $region29
    $region28: #{tpu_custom_call.1} parent=1 // pred_region
      %s1585 = ssub.s32 512, 512
      %1586 = vsyncadd [#allocation4], %s1585
      %s1588 = sshll.u32 [#allocation8], 4
      %s1589 = int_to_ptr.vmem [resolvable:$true] %s1588
      %1591 = dma.vmem_to_hbm [thread:$0]  %s1589, 512, %s3, [#allocation4]
    $region29: #{tpu_custom_call.1} parent=1 // pred_fallthru
      _
    // Predicated region
    $region30: #{tpu_custom_call.1} parent=1 // pred_check
      _
    $region31: #{tpu_custom_call.1} parent=1 // pred_check_branch
      %1593 = sbr.rel (0) target = $region33
    $region32: #{tpu_custom_call.1} parent=1 // pred_region
      %s1595 = ssub.s32 512, 512
      %1596 = vsyncadd [#allocation10], %s1595
      %s1598 = sshll.u32 [#allocation9], 4
      %s1599 = int_to_ptr.vmem [resolvable:$true] %s1598
      %1601 = dma.vmem_to_hbm [thread:$0]  %s1599, 512, %s4, [#allocation10]
    $region33: #{tpu_custom_call.1} parent=1 // pred_fallthru
      _
    // Predicated region
    $region34: #{tpu_custom_call.1} parent=1 // pred_check
      _
    $region35: #{tpu_custom_call.1} parent=1 // pred_check_branch
      %1603 = sbr.rel (0) target = $region37
    $region36: #{tpu_custom_call.1} parent=1 // pred_region
      %1604 = dma.done [#allocation4], 512
    $region37: #{tpu_custom_call.1} parent=1 // pred_fallthru
      _
    // Predicated region
    $region38: #{tpu_custom_call.1} parent=1 // pred_check
      _
    $region39: #{tpu_custom_call.1} parent=1 // pred_check_branch
      %1606 = sbr.rel (0) target = $region41
    $region40: #{tpu_custom_call.1} parent=1 // pred_region
      %1607 = dma.done [#allocation10], 512
    $region41: #{tpu_custom_call.1} parent=1 // pred_fallthru
      _
    %1608 = vsyncpa [#allocation3], 1
    %1609 = vsyncpa [#allocation6], 1
    %1610 = vsyncpa [#allocation4], 1
    %1611 = vsyncpa [#allocation10], 1

</llo_original>
